<compile_context>
chip_gen: v7x
topology: tpu7x:2x2x1
jax: 0.10.0
libtpu: 0.0.40
codegen_flags: <defaults>
</compile_context>

<pallas_src>
import functools

import numpy as np
import jax
import jax.numpy as jnp
from jax import lax
from jax.experimental import pallas as pl
from jax.experimental.pallas import tpu as pltpu

C0 = 16  # default in_channel of motif_1_4 (the pool itself is channel-agnostic)


def _maxpool3x3_kernel(x_ref, o_ref, *, H, W):
    """3x3 / stride 1 / pad 1 max pool, separable (1x3 then 3x1).

    x_ref / o_ref: (BR, H*W) -- each sublane row is one flattened (n, c)
    image, so lane-axis rolls never mix different (n, c) slices.  Wrapped
    elements are exactly the out-of-image neighbours and are excluded by the
    boundary masks.
    """
    acc = x_ref[...].astype(jnp.float32)      # exact for max; v5e has no bf16 VPU
    R, L = acc.shape

    # Boundary masks from a lane iota (static arithmetic, VPU-only).
    lane = lax.broadcasted_iota(jnp.int32, (R, L), 1)
    if W & (W - 1) == 0:
        w = jnp.bitwise_and(lane, W - 1)       # lane % W for power-of-two W
    else:
        # No hardware int divide on the VPU: embed the (1, L) column index as
        # a trace-time constant instead of computing lane % W in-kernel.
        w_np = (np.arange(L, dtype=np.int32) % W)[None, :]
        w = jnp.broadcast_to(jnp.asarray(w_np), (R, L))
    w_first = w == 0                           # column 0
    w_last = w == W - 1                        # column W-1
    h_first = lane < W                         # row 0
    h_last = lane >= (H - 1) * W               # row H-1

    # --- horizontal pass: max over (w-1, w, w+1) with implicit -inf padding ---
    left = pltpu.roll(acc, shift=1, axis=1)       # left[i]  = acc[i-1]
    right = pltpu.roll(acc, shift=L - 1, axis=1)  # right[i] = acc[i+1]
    hmax = jnp.where(w_first, acc, jnp.maximum(acc, left))
    hmax = jnp.where(w_last, hmax, jnp.maximum(hmax, right))

    # --- vertical pass: max over (h-1, h, h+1) of the horizontal maxima ---
    up = pltpu.roll(hmax, shift=W, axis=1)        # up[i]   = hmax[i-W]
    down = pltpu.roll(hmax, shift=L - W, axis=1)  # down[i] = hmax[i+W]
    out = jnp.where(h_first, hmax, jnp.maximum(hmax, up))
    out = jnp.where(h_last, out, jnp.maximum(out, down))

    o_ref[...] = out.astype(o_ref.dtype)


def _pick_block_rows(R, L, itemsize, target_block_bytes=1 << 20):
    """Largest multiple-of-8 divisor of R with block <= ~1 MiB.

    * tiny problems (or R not a multiple of 8) run as a single block
      (grid=(1,)) -- the per-step overhead dominates there anyway;
    * large problems get multiple ~1 MiB blocks, so the software pipeline has
      steps to overlap DMA with, and 4x block bytes (double-buffered in+out)
      stays well inside v7x's 64 MiB VMEM and v5e's 16 MiB scoped default.
    """
    total_bytes = R * L * itemsize
    if total_bytes <= (256 << 10) or R % 8 != 0:
        return R
    row_bytes = L * itemsize
    max_rows = max(8, (target_block_bytes // row_bytes) // 8 * 8)
    best = None
    for br in range(8, min(R, max_rows) + 1, 8):
        if R % br == 0:
            best = br
    return best if best is not None else R


@jax.jit
def motif_1_4_forward(x_nchw):
    """MaxPool2d(3, stride=1, padding=1) on an NCHW tensor, dtype-preserving."""
    N, C, H, W = x_nchw.shape
    R, L = N * C, H * W
    x2d = x_nchw.reshape(R, L)   # free view: NCHW memory is already (N*C, H*W)

    itemsize = jnp.dtype(x_nchw.dtype).itemsize
    br = _pick_block_rows(R, L, itemsize)
    grid = (R // br,)

    # Double-buffered in + out blocks resident at once; leave headroom.
    block_bytes = br * L * itemsize
    vmem_cap = int(min(max(8 * block_bytes, 4 << 20), 32 << 20))

    spec = pl.BlockSpec((br, L), lambda i: (i, 0))
    out2d = pl.pallas_call(
        functools.partial(_maxpool3x3_kernel, H=H, W=W),
        out_shape=jax.ShapeDtypeStruct((R, L), x_nchw.dtype),
        grid=grid,
        in_specs=[spec],
        out_specs=spec,
        compiler_params=pltpu.CompilerParams(
            dimension_semantics=("parallel",),
            vmem_limit_bytes=vmem_cap),
    )(x2d)
    return out2d.reshape(N, C, H, W)


def reference_forward(x_nchw):
    """Pure-JAX reference matching PyTorch MaxPool2d(3, stride=1, padding=1)."""
    return lax.reduce_window(
        x_nchw, jnp.asarray(-jnp.inf, x_nchw.dtype), lax.max,
        window_dimensions=(1, 1, 3, 3),
        window_strides=(1, 1, 1, 1),
        padding=[(0, 0), (0, 0), (1, 1), (1, 1)])


if __name__ == "__main__":
    key = jax.random.PRNGKey(0)
    x = jax.random.normal(key, (2, C0, 16, 16), jnp.float32)   # NCHW, like PyTorch

    out = motif_1_4_forward(x)
    out = jax.block_until_ready(out)
    assert out.shape == x.shape and out.dtype == x.dtype

    ref = reference_forward(x)
    np.testing.assert_allclose(np.asarray(out), np.asarray(ref), rtol=0, atol=0)

    # Native-dtype I/O path (dtype-preserving, bit-exact for max pooling).
    x_bf16 = x.astype(jnp.bfloat16)
    out_bf16 = jax.block_until_ready(motif_1_4_forward(x_bf16))
    assert out_bf16.dtype == jnp.bfloat16
    np.testing.assert_allclose(
        np.asarray(out_bf16, dtype=np.float32),
        np.asarray(reference_forward(x_bf16), dtype=np.float32),
        rtol=0, atol=0)

    print("KERNEL_OK")
</pallas_src>

<mosaic_0001>
module attributes {stable_mosaic.version = 11 : i64} {
  func.func @_maxpool3x3_kernel(%arg0: i32, %arg1: memref<32x256xf32, #tpu.memory_space<vmem>>, %arg2: memref<32x256xf32, #tpu.memory_space<vmem>>) attributes {dimension_semantics = [#tpu.dimension_semantics<parallel>], iteration_bounds = array<i64: 1>, scalar_prefetch = 0 : i64, scratch_operands = 0 : i64, tpu.core_type = #tpu.core_type<tc>, window_params = [{transform_indices = @transform_0, window_bounds = array<i64: 32, 256>}, {transform_indices = @transform_1, window_bounds = array<i64: 32, 256>}]} {
    %c0 = arith.constant 0 : index
    %c0_0 = arith.constant 0 : index
    %0 = vector.load %arg1[%c0, %c0_0] : memref<32x256xf32, #tpu.memory_space<vmem>>, vector<32x256xf32>
    %1 = tpu.iota {dimensions = array<i32: 1>} : vector<32x256xi32>
    %c15_i32 = arith.constant 15 : i32
    %2 = vector.broadcast %c15_i32 : i32 to vector<32x256xi32>
    %3 = arith.andi %1, %2 : vector<32x256xi32>
    %c0_i32 = arith.constant 0 : i32
    %4 = vector.broadcast %c0_i32 : i32 to vector<32x256xi32>
    %5 = arith.cmpi eq, %3, %4 : vector<32x256xi32>
    %c15_i32_1 = arith.constant 15 : i32
    %6 = vector.broadcast %c15_i32_1 : i32 to vector<32x256xi32>
    %7 = arith.cmpi eq, %3, %6 : vector<32x256xi32>
    %c16_i32 = arith.constant 16 : i32
    %8 = vector.broadcast %c16_i32 : i32 to vector<32x256xi32>
    %9 = arith.cmpi slt, %1, %8 : vector<32x256xi32>
    %c240_i32 = arith.constant 240 : i32
    %10 = vector.broadcast %c240_i32 : i32 to vector<32x256xi32>
    %11 = arith.cmpi sge, %1, %10 : vector<32x256xi32>
    %c1_i32 = arith.constant 1 : i32
    %12 = tpu.dynamic_rotate %0 by %c1_i32 dim 1 : vector<32x256xf32>, i32 -> vector<32x256xf32>
    %c255_i32 = arith.constant 255 : i32
    %13 = tpu.dynamic_rotate %0 by %c255_i32 dim 1 : vector<32x256xf32>, i32 -> vector<32x256xf32>
    %14 = arith.maximumf %0, %12 : vector<32x256xf32>
    %15 = arith.select %5, %0, %14 : vector<32x256xi1>, vector<32x256xf32>
    %16 = arith.maximumf %15, %13 : vector<32x256xf32>
    %17 = arith.select %7, %15, %16 : vector<32x256xi1>, vector<32x256xf32>
    %c16_i32_2 = arith.constant 16 : i32
    %18 = tpu.dynamic_rotate %17 by %c16_i32_2 dim 1 : vector<32x256xf32>, i32 -> vector<32x256xf32>
    %c240_i32_3 = arith.constant 240 : i32
    %19 = tpu.dynamic_rotate %17 by %c240_i32_3 dim 1 : vector<32x256xf32>, i32 -> vector<32x256xf32>
    %20 = arith.maximumf %17, %18 : vector<32x256xf32>
    %21 = arith.select %9, %17, %20 : vector<32x256xi1>, vector<32x256xf32>
    %22 = arith.maximumf %21, %19 : vector<32x256xf32>
    %23 = arith.select %11, %21, %22 : vector<32x256xi1>, vector<32x256xf32>
    %c0_4 = arith.constant 0 : index
    %c0_5 = arith.constant 0 : index
    %24 = vector.load %arg2[%c0_4, %c0_5] : memref<32x256xf32, #tpu.memory_space<vmem>>, vector<32x256xf32>
    tpu.vector_store %arg2[%c0_4, %c0_5], %23 {strides = array<i32>} : memref<32x256xf32, #tpu.memory_space<vmem>>, vector<32x256xf32>,
    return
  }
  func.func @transform_0(%arg0: i32) -> (i32, i32) {
    %c0_i32 = arith.constant 0 : i32
    %c0_i32_0 = arith.constant 0 : i32
    return %arg0, %c0_i32 : i32, i32
  }
  func.func @transform_1(%arg0: i32) -> (i32, i32) {
    %c0_i32 = arith.constant 0 : i32
    %c0_i32_0 = arith.constant 0 : i32
    return %arg0, %c0_i32 : i32, i32
  }
}

</mosaic_0001>

<llo_original>
// kernel: motif_1_4_forward.1
$region0: #{motif_1_4_forward.1}
  #allocation0 [shape = 'u32[]', space=smem, size = 0x4, offset = 0x4, fixed_abs, tag = 'smem constant byte address 0x4 - core index']
  #allocation1 [shape = 'u32[144,128]{1,0:T(1,128)}', space=vmem, size = 0x12000, scoped, tag = 'internal scratch']
  %s0 = inlined_call_operand.vmem [shape: f32[32,256], index: 0, kind: input, shape index: {}]
  %s1 = inlined_call_operand.vmem [shape: f32[32,256], index: 1, kind: output, shape index: {}]
  %s2 = sld [smem:[#allocation0]]
  $region14: #{motif_1_4_forward.1} parent=0
    _
  %s4 = ssub.s32 1, %s2
  %s5 = scalar_select 0, %s4, %s2
  // Predicated region
  $region2: #{motif_1_4_forward.1} parent=0 // pred_check
    _
  $region3: #{motif_1_4_forward.1} parent=0 // pred_check_branch
    %7 = sbr.rel (0) target = $region5
  $region4: #{motif_1_4_forward.1} parent=0 // pred_region
    _
  $region5: #{motif_1_4_forward.1} parent=0 // pred_fallthru
    _
  %v8 = vld [vmem:[%s0] sm:$0xff]
  %v9 = vld [vmem:[%s0 + $0x8] sm:$0xff]
  %v10 = vld [vmem:[%s0 + $0x10] sm:$0xff]
  %v11 = vld [vmem:[%s0 + $0x18] sm:$0xff]
  %v12 = vld [vmem:[%s0 + $0x20] sm:$0xff]
  %v13 = vld [vmem:[%s0 + $0x28] sm:$0xff]
  %v14 = vld [vmem:[%s0 + $0x30] sm:$0xff]
  %v15 = vld [vmem:[%s0 + $0x38] sm:$0xff]
  %v16 = vlaneseq
  %v17 = vand.u32 %v16, 127
  %v18 = vadd.s32 %v17, 128
  %v19 = vand.u32 %v17, 15
  %v20 = vand.u32 %v18, 15
  %vm21 = vcmp.eq.s32.totalorder %v19, 0
  %vm22 = vcmp.eq.s32.totalorder %v20, 0
  %vm23 = vcmp.eq.s32.totalorder %v19, 15
  %vm24 = vcmp.eq.s32.totalorder %v20, 15
  %vm25 = vcmp.lt.s32.totalorder %v17, 16
  %vm26 = vcmp.lt.s32.totalorder %v18, 16
  %vm27 = vcmp.ge.s32.totalorder %v17, 240
  %vm28 = vcmp.ge.s32.totalorder %v18, 240
  %29 = vrot.lane.b32.xlu0 %v8, 1
  %v30 = vpop.permute.xlu0 %29
  %31 = vrot.lane.b32.xlu0 %v10, 1
  %v32 = vpop.permute.xlu0 %31
  %33 = vrot.lane.b32.xlu0 %v12, 1
  %v34 = vpop.permute.xlu0 %33
  %35 = vrot.lane.b32.xlu0 %v14, 1
  %v36 = vpop.permute.xlu0 %35
  %37 = vrot.lane.b32.xlu0 %v9, 1
  %v38 = vpop.permute.xlu0 %37
  %39 = vrot.lane.b32.xlu0 %v11, 1
  %v40 = vpop.permute.xlu0 %39
  %41 = vrot.lane.b32.xlu0 %v13, 1
  %v42 = vpop.permute.xlu0 %41
  %43 = vrot.lane.b32.xlu0 %v15, 1
  %v44 = vpop.permute.xlu0 %43
  %vm45 = vcmp.lt.s32.totalorder %v17, 1
  %v46 = vsel %vm45, %v30, %v38
  %v47 = vsel %vm45, %v32, %v40
  %v48 = vsel %vm45, %v34, %v42
  %v49 = vsel %vm45, %v36, %v44
  %v50 = vsel %vm45, %v38, %v30
  %v51 = vsel %vm45, %v40, %v32
  %v52 = vsel %vm45, %v42, %v34
  %v53 = vsel %vm45, %v44, %v36
  %54 = vrot.lane.b32.xlu0 %v8, 127
  %v55 = vpop.permute.xlu0 %54
  %56 = vrot.lane.b32.xlu0 %v10, 127
  %v57 = vpop.permute.xlu0 %56
  %58 = vrot.lane.b32.xlu0 %v12, 127
  %v59 = vpop.permute.xlu0 %58
  %60 = vrot.lane.b32.xlu0 %v14, 127
  %v61 = vpop.permute.xlu0 %60
  %62 = vrot.lane.b32.xlu0 %v9, 127
  %v63 = vpop.permute.xlu0 %62
  %64 = vrot.lane.b32.xlu0 %v11, 127
  %v65 = vpop.permute.xlu0 %64
  %66 = vrot.lane.b32.xlu0 %v13, 127
  %v67 = vpop.permute.xlu0 %66
  %68 = vrot.lane.b32.xlu0 %v15, 127
  %v69 = vpop.permute.xlu0 %68
  %vm70 = vcmp.lt.s32.totalorder %v17, 127
  %v71 = vsel %vm70, %v55, %v63
  %v72 = vsel %vm70, %v57, %v65
  %v73 = vsel %vm70, %v59, %v67
  %v74 = vsel %vm70, %v61, %v69
  %v75 = vsel %vm70, %v63, %v55
  %v76 = vsel %vm70, %v65, %v57
  %v77 = vsel %vm70, %v67, %v59
  %v78 = vsel %vm70, %v69, %v61
  %v79 = vmax.f32 %v8, %v50
  %v80 = vmax.f32 %v9, %v46
  %v81 = vmax.f32 %v10, %v51
  %v82 = vmax.f32 %v11, %v47
  %v83 = vmax.f32 %v12, %v52
  %v84 = vmax.f32 %v13, %v48
  %v85 = vmax.f32 %v14, %v53
  %v86 = vmax.f32 %v15, %v49
  %v87 = vsel %vm21, %v8, %v79
  %v88 = vsel %vm22, %v9, %v80
  %v89 = vsel %vm21, %v10, %v81
  %v90 = vsel %vm22, %v11, %v82
  %v91 = vsel %vm21, %v12, %v83
  %v92 = vsel %vm22, %v13, %v84
  %v93 = vsel %vm21, %v14, %v85
  %v94 = vsel %vm22, %v15, %v86
  %v95 = vmax.f32 %v87, %v71
  %v96 = vmax.f32 %v88, %v75
  %v97 = vmax.f32 %v89, %v72
  %v98 = vmax.f32 %v90, %v76
  %v99 = vmax.f32 %v91, %v73
  %v100 = vmax.f32 %v92, %v77
  %v101 = vmax.f32 %v93, %v74
  %v102 = vmax.f32 %v94, %v78
  %v103 = vsel %vm23, %v87, %v95
  %v104 = vsel %vm24, %v88, %v96
  %v105 = vsel %vm23, %v89, %v97
  %v106 = vsel %vm24, %v90, %v98
  %v107 = vsel %vm23, %v91, %v99
  %v108 = vsel %vm24, %v92, %v100
  %v109 = vsel %vm23, %v93, %v101
  %v110 = vsel %vm24, %v94, %v102
  %111 = vrot.lane.b32.xlu0 %v103, 16
  %v112 = vpop.permute.xlu0 %111
  %113 = vrot.lane.b32.xlu0 %v105, 16
  %v114 = vpop.permute.xlu0 %113
  %115 = vrot.lane.b32.xlu0 %v107, 16
  %v116 = vpop.permute.xlu0 %115
  %117 = vrot.lane.b32.xlu0 %v109, 16
  %v118 = vpop.permute.xlu0 %117
  %119 = vrot.lane.b32.xlu0 %v104, 16
  %v120 = vpop.permute.xlu0 %119
  %121 = vrot.lane.b32.xlu0 %v106, 16
  %v122 = vpop.permute.xlu0 %121
  %123 = vrot.lane.b32.xlu0 %v108, 16
  %v124 = vpop.permute.xlu0 %123
  %125 = vrot.lane.b32.xlu0 %v110, 16
  %v126 = vpop.permute.xlu0 %125
  %v127 = vsel %vm25, %v112, %v120
  %v128 = vsel %vm25, %v114, %v122
  %v129 = vsel %vm25, %v116, %v124
  %v130 = vsel %vm25, %v118, %v126
  %v131 = vsel %vm25, %v120, %v112
  %v132 = vsel %vm25, %v122, %v114
  %v133 = vsel %vm25, %v124, %v116
  %v134 = vsel %vm25, %v126, %v118
  %135 = vrot.lane.b32.xlu0 %v103, 112
  %v136 = vpop.permute.xlu0 %135
  %137 = vrot.lane.b32.xlu0 %v105, 112
  %v138 = vpop.permute.xlu0 %137
  %139 = vrot.lane.b32.xlu0 %v107, 112
  %v140 = vpop.permute.xlu0 %139
  %141 = vrot.lane.b32.xlu0 %v109, 112
  %v142 = vpop.permute.xlu0 %141
  %143 = vrot.lane.b32.xlu0 %v104, 112
  %v144 = vpop.permute.xlu0 %143
  %145 = vrot.lane.b32.xlu0 %v106, 112
  %v146 = vpop.permute.xlu0 %145
  %147 = vrot.lane.b32.xlu0 %v108, 112
  %v148 = vpop.permute.xlu0 %147
  %149 = vrot.lane.b32.xlu0 %v110, 112
  %v150 = vpop.permute.xlu0 %149
  %vm151 = vcmp.lt.s32.totalorder %v17, 112
  %v152 = vsel %vm151, %v136, %v144
  %v153 = vsel %vm151, %v138, %v146
  %v154 = vsel %vm151, %v140, %v148
  %v155 = vsel %vm151, %v142, %v150
  %v156 = vsel %vm151, %v144, %v136
  %v157 = vsel %vm151, %v146, %v138
  %v158 = vsel %vm151, %v148, %v140
  %v159 = vsel %vm151, %v150, %v142
  %v160 = vmax.f32 %v103, %v131
  %v161 = vmax.f32 %v104, %v127
  %v162 = vmax.f32 %v105, %v132
  %v163 = vmax.f32 %v106, %v128
  %v164 = vmax.f32 %v107, %v133
  %v165 = vmax.f32 %v108, %v129
  %v166 = vmax.f32 %v109, %v134
  %v167 = vmax.f32 %v110, %v130
  %v168 = vsel %vm25, %v103, %v160
  %v169 = vsel %vm26, %v104, %v161
  %v170 = vsel %vm25, %v105, %v162
  %v171 = vsel %vm26, %v106, %v163
  %v172 = vsel %vm25, %v107, %v164
  %v173 = vsel %vm26, %v108, %v165
  %v174 = vsel %vm25, %v109, %v166
  %v175 = vsel %vm26, %v110, %v167
  %v176 = vmax.f32 %v168, %v152
  %v177 = vmax.f32 %v169, %v156
  %v178 = vmax.f32 %v170, %v153
  %v179 = vmax.f32 %v171, %v157
  %v180 = vmax.f32 %v172, %v154
  %v181 = vmax.f32 %v173, %v158
  %v182 = vmax.f32 %v174, %v155
  %v183 = vmax.f32 %v175, %v159
  %v184 = vsel %vm27, %v168, %v176
  %v185 = vsel %vm28, %v169, %v177
  %v186 = vsel %vm27, %v170, %v178
  %v187 = vsel %vm28, %v171, %v179
  %v188 = vsel %vm27, %v172, %v180
  %v189 = vsel %vm28, %v173, %v181
  %v190 = vsel %vm27, %v174, %v182
  %v191 = vsel %vm28, %v175, %v183
  %192 = vst [vmem:[%s1] sm:$0xff] %v184
  %193 = vst [vmem:[%s1 + $0x8] sm:$0xff] %v185
  %194 = vst [vmem:[%s1 + $0x10] sm:$0xff] %v186
  %195 = vst [vmem:[%s1 + $0x18] sm:$0xff] %v187
  %196 = vst [vmem:[%s1 + $0x20] sm:$0xff] %v188
  %197 = vst [vmem:[%s1 + $0x28] sm:$0xff] %v189
  %198 = vst [vmem:[%s1 + $0x30] sm:$0xff] %v190
  %199 = vst [vmem:[%s1 + $0x38] sm:$0xff] %v191
  // Predicated region
  $region6: #{motif_1_4_forward.1} parent=0 // pred_check
    _
  $region7: #{motif_1_4_forward.1} parent=0 // pred_check_branch
    %201 = sbr.rel (0) target = $region9
  $region8: #{motif_1_4_forward.1} parent=0 // pred_region
    _
  $region9: #{motif_1_4_forward.1} parent=0 // pred_fallthru
    _
  // Predicated region
  $region10: #{motif_1_4_forward.1} parent=0 // pred_check
    _
  $region11: #{motif_1_4_forward.1} parent=0 // pred_check_branch
    %203 = sbr.rel (0) target = $region13
  $region12: #{motif_1_4_forward.1} parent=0 // pred_region
    _
  $region13: #{motif_1_4_forward.1} parent=0 // pred_fallthru
    _

</llo_original>
